<compile_context>
chip_gen: v5e
topology: v5e:2x2
jax: 0.10.0
libtpu: 0.0.40
codegen_flags: <defaults>
</compile_context>

<pallas_src>
import jax
import jax.numpy as jnp
from jax.experimental import pallas as pl
from jax.experimental.pallas import tpu as pltpu

_LANE = 128
_SUBLANE = 8
_TB_CAP = 2048          # rows per batch tile; few MiB of VMEM, amortizes ~0.35 µs/step


def _round_up(x, m):
    return ((x + m - 1) // m) * m


# ----------------------------- Pallas kernel --------------------------------
def _shap_forward_kernel(
    x_ref,      # [TB, Din]        f32   combined (spectral | metabolite) rows
    we_ref,     # [Din, ENC_P]     f32   packed encoder weight (Ws | Wm in one lane group)
    be_ref,     # [1, ENC_P]       f32   encoder bias (bs | bm), zero padded
    wf_ref,     # [ENC_P, H_P]     bf16  packed fusion weight [Wf_s; Wf_m]
    bf_ref,     # [1, H_P]         f32   fusion bias, zero padded
    wh_ref,     # [H_P, C_P]       bf16  task head weight, zero padded
    bh_ref,     # [1, C_P]         f32   task head bias, zero padded
    out_ref,    # [TB, C]          f32   task logits (narrow, unpadded lanes)
):
    x = x_ref[...]                                      # keep f32 into the first matmul

    # Both encoders in one MXU matmul: cols [0:H) -> hs, cols [H:2H) -> hm,
    # padding lanes stay exactly 0 (gelu(0) == 0).
    h = jnp.dot(x, we_ref[...], preferred_element_type=jnp.float32) + be_ref[...]
    h = jax.nn.gelu(h, approximate=True)
    # TODO(synk): original transformer is unavailable; tanh-GELU synthetic head is
    # used here (PyTorch nn.GELU defaults to the exact erf formulation).

    # concat([hs, hm]) @ Wf  ==  h @ [Wf_s; Wf_m]  (zero-padded rows contribute nothing).
    f = jnp.dot(h.astype(wf_ref.dtype), wf_ref[...],
                preferred_element_type=jnp.float32) + bf_ref[...]
    f = jax.nn.gelu(f, approximate=True)

    # Task head (only the requested task's head is materialized).
    logits = jnp.dot(f.astype(wh_ref.dtype), wh_ref[...],
                     preferred_element_type=jnp.float32) + bh_ref[...]
    out_ref[...] = logits[:, : out_ref.shape[1]].astype(out_ref.dtype)


# ------------------------------ Python wrapper -------------------------------
class ShapModelWrapperPallas:
    """JAX/Pallas equivalent of the PyTorch ShapModelWrapper forward pass."""

    def __init__(self, spectral_dim, metabolite_dim, hidden_dim, num_classes, key):
        self.spectral_dim = spectral_dim
        self.metabolite_dim = metabolite_dim
        self.hidden_dim = hidden_dim
        self.num_classes = num_classes

        ds, dm, h, c = spectral_dim, metabolite_dim, hidden_dim, num_classes
        self.din = ds + dm
        self.enc_pad = _round_up(2 * h, _LANE)   # both encoder outputs share one lane group
        self.h_pad = _round_up(h, _LANE)
        self.c_pad = _round_up(c, _LANE)

        ks = jax.random.split(key, 9)
        scale = 0.05
        f32 = jnp.float32
        # Unpadded "true" parameters (also used by the pure-JAX reference).
        self.params = dict(
            ws=jax.random.normal(ks[0], (ds, h), f32) * scale,
            bs=jax.random.normal(ks[1], (1, h), f32) * scale,
            wm=jax.random.normal(ks[2], (dm, h), f32) * scale,
            bm=jax.random.normal(ks[3], (1, h), f32) * scale,
            wf_s=jax.random.normal(ks[4], (h, h), f32) * scale,
            wf_m=jax.random.normal(ks[5], (h, h), f32) * scale,
            bf=jax.random.normal(ks[6], (1, h), f32) * scale,
            wh=jax.random.normal(ks[7], (h, c), f32) * scale,
            bh=jax.random.normal(ks[8], (1, c), f32) * scale,
        )
        p = self.params
        ep, hp, cp = self.enc_pad, self.h_pad, self.c_pad

        # Packed block-diagonal encoder weight: combined @ W_enc == [spec@Ws | metab@Wm]
        # with hs in cols [0:h) and hm in cols [h:2h) of a single lane group.
        w_enc = jnp.zeros((self.din, ep), f32)
        w_enc = w_enc.at[:ds, :h].set(p["ws"])
        w_enc = w_enc.at[ds:ds + dm, h:2 * h].set(p["wm"])
        b_enc = jnp.zeros((1, ep), f32)
        b_enc = b_enc.at[0, :h].set(p["bs"][0])
        b_enc = b_enc.at[0, h:2 * h].set(p["bm"][0])

        # Packed fusion weight: [hs | hm | 0] @ [Wf_s; Wf_m; 0] == hs@Wf_s + hm@Wf_m.
        w_fus = jnp.zeros((ep, hp), f32)
        w_fus = w_fus.at[:h, :h].set(p["wf_s"])
        w_fus = w_fus.at[h:2 * h, :h].set(p["wf_m"])
        b_fus = jnp.zeros((1, hp), f32)
        b_fus = b_fus.at[0, :h].set(p["bf"][0])

        # Task head, zero padded to 128 lanes (padded logits are exactly 0).
        w_head = jnp.zeros((hp, cp), f32)
        w_head = w_head.at[:h, :c].set(p["wh"])
        b_head = jnp.zeros((1, cp), f32)
        b_head = b_head.at[0, :c].set(p["bh"][0])

        # First-layer weight stays f32 (input fidelity); later weights bf16
        # (MXU-native); biases stay f32 (added to f32 accumulators).
        self.w_enc = w_enc
        self.b_enc = b_enc
        self.w_fus = w_fus.astype(jnp.bfloat16)
        self.b_fus = b_fus
        self.w_head = w_head.astype(jnp.bfloat16)
        self.b_head = b_head

    # Pure-JAX reference (unpadded, f32) — mirrors the PyTorch forward.
    def reference(self, combined_input):
        x = jnp.asarray(combined_input, jnp.float32)
        spec = x[:, : self.spectral_dim]
        metab = x[:, self.spectral_dim: self.spectral_dim + self.metabolite_dim]
        p = self.params
        hs = jax.nn.gelu(spec @ p["ws"] + p["bs"], approximate=True)
        hm = jax.nn.gelu(metab @ p["wm"] + p["bm"], approximate=True)
        fused = jax.nn.gelu(hs @ p["wf_s"] + hm @ p["wf_m"] + p["bf"], approximate=True)
        return fused @ p["wh"] + p["bh"]

    def _pick_tile(self, batch):
        if batch <= 1024:
            # Single block equal to the full batch dim: always a legal block
            # shape (no sublane-multiple requirement, no padded/ragged rows).
            return min(batch, _TB_CAP)
        # Large batch: >= 2 grid steps so v7x's two TensorCores both get work;
        # tile a multiple of 8 sublanes, capped to keep VMEM use small.
        tb = _round_up(pl.cdiv(batch, 2), _SUBLANE)
        return max(_SUBLANE, min(_TB_CAP, tb))

    def __call__(self, combined_input):
        x = jnp.asarray(combined_input, dtype=jnp.float32)
        batch = x.shape[0]
        assert x.shape[1] == self.din, "combined input must be [B, Ds+Dm]"

        tb = self._pick_tile(batch)
        grid = (pl.cdiv(batch, tb),)          # ragged last block: OOB writes dropped

        ep, hp, cp = self.enc_pad, self.h_pad, self.c_pad
        weight_bytes = (4 * self.w_enc.size
                        + 2 * (self.w_fus.size + self.w_head.size)
                        + 4 * (self.b_enc.size + self.b_fus.size + self.b_head.size))
        cost = pl.CostEstimate(
            flops=2 * batch * (self.din * ep + ep * hp + hp * cp),
            transcendentals=batch * (ep + hp),
            bytes_accessed=4 * batch * self.din + 4 * batch * self.num_classes + weight_bytes,
        )

        out = pl.pallas_call(
            _shap_forward_kernel,
            out_shape=jax.ShapeDtypeStruct((batch, self.num_classes), jnp.float32),
            grid=grid,
            in_specs=[
                # Streamed batch tile, unpadded f32 (last block dim == full array dim).
                pl.BlockSpec((tb, self.din), lambda i: (i, 0)),
                # Weights/biases: constant block index -> fetched once, VMEM-resident.
                pl.BlockSpec(self.w_enc.shape, lambda i: (0, 0)),
                pl.BlockSpec(self.b_enc.shape, lambda i: (0, 0)),
                pl.BlockSpec(self.w_fus.shape, lambda i: (0, 0)),
                pl.BlockSpec(self.b_fus.shape, lambda i: (0, 0)),
                pl.BlockSpec(self.w_head.shape, lambda i: (0, 0)),
                pl.BlockSpec(self.b_head.shape, lambda i: (0, 0)),
            ],
            # Narrow output block: [tb, num_classes] f32, no padded lanes/rows in HBM.
            out_specs=pl.BlockSpec((tb, self.num_classes), lambda i: (i, 0)),
            compiler_params=pltpu.CompilerParams(
                dimension_semantics=("parallel",),   # shard batch across v7x TCs
            ),
            cost_estimate=cost,
        )(x, self.w_enc, self.b_enc, self.w_fus, self.b_fus,
          self.w_head, self.b_head)

        # Original wrapper returns outputs[self.task_name]; already unpadded.
        return out


# ---------------------------------- main -------------------------------------
if __name__ == "__main__":
    key = jax.random.PRNGKey(0)
    k_in, k_params = jax.random.split(key)

    batch = 4
    spectral_dim = 24
    metabolite_dim = 8
    hidden_dim = 32
    num_classes = 3

    model = ShapModelWrapperPallas(
        spectral_dim=spectral_dim,
        metabolite_dim=metabolite_dim,
        hidden_dim=hidden_dim,
        num_classes=num_classes,
        key=k_params,
    )

    combined_input = jax.random.normal(
        k_in, (batch, spectral_dim + metabolite_dim), dtype=jnp.float32
    )

    logits = model(combined_input)
    jax.block_until_ready(logits)
    assert logits.shape == (batch, num_classes)

    # Sanity check against the unpadded f32 reference (bf16-tolerance on layers 2/3).
    ref = model.reference(combined_input)
    max_err = float(jnp.max(jnp.abs(logits - ref)))
    assert max_err < 5e-2, f"mismatch vs reference: {max_err}"

    print("KERNEL_OK")
</pallas_src>

<mosaic_0001>
module attributes {stable_mosaic.version = 11 : i64} {
  func.func @_shap_forward_kernel(%arg0: i32, %arg1: memref<4x32xf32, #tpu.memory_space<vmem>>, %arg2: memref<32x128xf32, #tpu.memory_space<vmem>>, %arg3: memref<1x128xf32, #tpu.memory_space<vmem>>, %arg4: memref<128x128xbf16, #tpu.memory_space<vmem>>, %arg5: memref<1x128xf32, #tpu.memory_space<vmem>>, %arg6: memref<128x128xbf16, #tpu.memory_space<vmem>>, %arg7: memref<1x128xf32, #tpu.memory_space<vmem>>, %arg8: memref<4x3xf32, #tpu.memory_space<vmem>>) attributes {dimension_semantics = [#tpu.dimension_semantics<parallel>], iteration_bounds = array<i64: 1>, scalar_prefetch = 0 : i64, scratch_operands = 0 : i64, tpu.core_type = #tpu.core_type<tc>, window_params = [{transform_indices = @transform_0, window_bounds = array<i64: 4, 32>}, {pipeline_mode = #tpu.pipeline_mode<synchronous>, transform_indices = @transform_1, window_bounds = array<i64: 32, 128>}, {pipeline_mode = #tpu.pipeline_mode<synchronous>, transform_indices = @transform_2, window_bounds = array<i64: 1, 128>}, {pipeline_mode = #tpu.pipeline_mode<synchronous>, transform_indices = @transform_3, window_bounds = array<i64: 128, 128>}, {pipeline_mode = #tpu.pipeline_mode<synchronous>, transform_indices = @transform_4, window_bounds = array<i64: 1, 128>}, {pipeline_mode = #tpu.pipeline_mode<synchronous>, transform_indices = @transform_5, window_bounds = array<i64: 128, 128>}, {pipeline_mode = #tpu.pipeline_mode<synchronous>, transform_indices = @transform_6, window_bounds = array<i64: 1, 128>}, {transform_indices = @transform_7, window_bounds = array<i64: 4, 3>}]} {
    %c0 = arith.constant 0 : index
    %c0_0 = arith.constant 0 : index
    %0 = vector.load %arg1[%c0, %c0_0] : memref<4x32xf32, #tpu.memory_space<vmem>>, vector<4x32xf32>
    %c0_1 = arith.constant 0 : index
    %c0_2 = arith.constant 0 : index
    %1 = vector.load %arg2[%c0_1, %c0_2] : memref<32x128xf32, #tpu.memory_space<vmem>>, vector<32x128xf32>
    %cst = arith.constant dense<0.000000e+00> : vector<4x128xf32>
    %2 = tpu.matmul %0, %1, %cst {dimension_numbers = #tpu.dot_dimension_numbers<[1], [0], [0], [1], [0, 0, 1, 1], [], []>} : vector<4x32xf32>, vector<32x128xf32>, vector<4x128xf32> -> vector<4x128xf32>
    %c0_3 = arith.constant 0 : index
    %c0_4 = arith.constant 0 : index
    %3 = vector.load %arg3[%c0_3, %c0_4] : memref<1x128xf32, #tpu.memory_space<vmem>>, vector<1x128xf32>
    %4 = vector.broadcast %3 : vector<1x128xf32> to vector<4x128xf32>
    %5 = arith.addf %2, %4 : vector<4x128xf32>
    %6 = arith.mulf %5, %5 : vector<4x128xf32>
    %7 = arith.mulf %5, %6 : vector<4x128xf32>
    %cst_5 = arith.constant 4.471500e-02 : f32
    %8 = vector.broadcast %cst_5 : f32 to vector<4x128xf32>
    %9 = arith.mulf %8, %7 : vector<4x128xf32>
    %10 = arith.addf %5, %9 : vector<4x128xf32>
    %cst_6 = arith.constant 0.797884583 : f32
    %11 = vector.broadcast %cst_6 : f32 to vector<4x128xf32>
    %12 = arith.mulf %11, %10 : vector<4x128xf32>
    %13 = math.tanh %12 : vector<4x128xf32>
    %cst_7 = arith.constant 1.000000e+00 : f32
    %14 = vector.broadcast %cst_7 : f32 to vector<4x128xf32>
    %15 = arith.addf %14, %13 : vector<4x128xf32>
    %cst_8 = arith.constant 5.000000e-01 : f32
    %16 = vector.broadcast %cst_8 : f32 to vector<4x128xf32>
    %17 = arith.mulf %16, %15 : vector<4x128xf32>
    %18 = arith.mulf %5, %17 : vector<4x128xf32>
    %19 = arith.truncf %18 : vector<4x128xf32> to vector<4x128xbf16>
    %c0_9 = arith.constant 0 : index
    %c0_10 = arith.constant 0 : index
    %20 = vector.load %arg4[%c0_9, %c0_10] : memref<128x128xbf16, #tpu.memory_space<vmem>>, vector<128x128xbf16>
    %cst_11 = arith.constant dense<0.000000e+00> : vector<4x128xf32>
    %21 = tpu.matmul %19, %20, %cst_11 {dimension_numbers = #tpu.dot_dimension_numbers<[1], [0], [0], [1], [0, 0, 1, 1], [], []>} : vector<4x128xbf16>, vector<128x128xbf16>, vector<4x128xf32> -> vector<4x128xf32>
    %c0_12 = arith.constant 0 : index
    %c0_13 = arith.constant 0 : index
    %22 = vector.load %arg5[%c0_12, %c0_13] : memref<1x128xf32, #tpu.memory_space<vmem>>, vector<1x128xf32>
    %23 = vector.broadcast %22 : vector<1x128xf32> to vector<4x128xf32>
    %24 = arith.addf %21, %23 : vector<4x128xf32>
    %25 = arith.mulf %24, %24 : vector<4x128xf32>
    %26 = arith.mulf %24, %25 : vector<4x128xf32>
    %cst_14 = arith.constant 4.471500e-02 : f32
    %27 = vector.broadcast %cst_14 : f32 to vector<4x128xf32>
    %28 = arith.mulf %27, %26 : vector<4x128xf32>
    %29 = arith.addf %24, %28 : vector<4x128xf32>
    %cst_15 = arith.constant 0.797884583 : f32
    %30 = vector.broadcast %cst_15 : f32 to vector<4x128xf32>
    %31 = arith.mulf %30, %29 : vector<4x128xf32>
    %32 = math.tanh %31 : vector<4x128xf32>
    %cst_16 = arith.constant 1.000000e+00 : f32
    %33 = vector.broadcast %cst_16 : f32 to vector<4x128xf32>
    %34 = arith.addf %33, %32 : vector<4x128xf32>
    %cst_17 = arith.constant 5.000000e-01 : f32
    %35 = vector.broadcast %cst_17 : f32 to vector<4x128xf32>
    %36 = arith.mulf %35, %34 : vector<4x128xf32>
    %37 = arith.mulf %24, %36 : vector<4x128xf32>
    %38 = arith.truncf %37 : vector<4x128xf32> to vector<4x128xbf16>
    %c0_18 = arith.constant 0 : index
    %c0_19 = arith.constant 0 : index
    %39 = vector.load %arg6[%c0_18, %c0_19] : memref<128x128xbf16, #tpu.memory_space<vmem>>, vector<128x128xbf16>
    %cst_20 = arith.constant dense<0.000000e+00> : vector<4x128xf32>
    %40 = tpu.matmul %38, %39, %cst_20 {dimension_numbers = #tpu.dot_dimension_numbers<[1], [0], [0], [1], [0, 0, 1, 1], [], []>} : vector<4x128xbf16>, vector<128x128xbf16>, vector<4x128xf32> -> vector<4x128xf32>
    %c0_21 = arith.constant 0 : index
    %c0_22 = arith.constant 0 : index
    %41 = vector.load %arg7[%c0_21, %c0_22] : memref<1x128xf32, #tpu.memory_space<vmem>>, vector<1x128xf32>
    %42 = vector.broadcast %41 : vector<1x128xf32> to vector<4x128xf32>
    %43 = arith.addf %40, %42 : vector<4x128xf32>
    %44 = vector.extract_strided_slice %43 {offsets = [0, 0], sizes = [4, 3], strides = [1, 1]} : vector<4x128xf32> to vector<4x3xf32>
    %c0_23 = arith.constant 0 : index
    %c0_24 = arith.constant 0 : index
    %45 = vector.load %arg8[%c0_23, %c0_24] : memref<4x3xf32, #tpu.memory_space<vmem>>, vector<4x3xf32>
    tpu.vector_store %arg8[%c0_23, %c0_24], %44 {strides = array<i32>} : memref<4x3xf32, #tpu.memory_space<vmem>>, vector<4x3xf32>,
    return
  }
  func.func @transform_0(%arg0: i32) -> (i32, i32) {
    %c0_i32 = arith.constant 0 : i32
    %c0_i32_0 = arith.constant 0 : i32
    return %arg0, %c0_i32 : i32, i32
  }
  func.func @transform_1(%arg0: i32) -> (i32, i32) {
    %c0_i32 = arith.constant 0 : i32
    %c0_i32_0 = arith.constant 0 : i32
    %c0_i32_1 = arith.constant 0 : i32
    return %c0_i32, %c0_i32_0 : i32, i32
  }
  func.func @transform_2(%arg0: i32) -> (i32, i32) {
    %c0_i32 = arith.constant 0 : i32
    %c0_i32_0 = arith.constant 0 : i32
    %c0_i32_1 = arith.constant 0 : i32
    return %c0_i32, %c0_i32_0 : i32, i32
  }
  func.func @transform_3(%arg0: i32) -> (i32, i32) {
    %c0_i32 = arith.constant 0 : i32
    %c0_i32_0 = arith.constant 0 : i32
    %c0_i32_1 = arith.constant 0 : i32
    return %c0_i32, %c0_i32_0 : i32, i32
  }
  func.func @transform_4(%arg0: i32) -> (i32, i32) {
    %c0_i32 = arith.constant 0 : i32
    %c0_i32_0 = arith.constant 0 : i32
    %c0_i32_1 = arith.constant 0 : i32
    return %c0_i32, %c0_i32_0 : i32, i32
  }
  func.func @transform_5(%arg0: i32) -> (i32, i32) {
    %c0_i32 = arith.constant 0 : i32
    %c0_i32_0 = arith.constant 0 : i32
    %c0_i32_1 = arith.constant 0 : i32
    return %c0_i32, %c0_i32_0 : i32, i32
  }
  func.func @transform_6(%arg0: i32) -> (i32, i32) {
    %c0_i32 = arith.constant 0 : i32
    %c0_i32_0 = arith.constant 0 : i32
    %c0_i32_1 = arith.constant 0 : i32
    return %c0_i32, %c0_i32_0 : i32, i32
  }
  func.func @transform_7(%arg0: i32) -> (i32, i32) {
    %c0_i32 = arith.constant 0 : i32
    %c0_i32_0 = arith.constant 0 : i32
    return %arg0, %c0_i32 : i32, i32
  }
}

</mosaic_0001>

<llo_original>
// kernel: tpu_custom_call.1
$region0: #{tpu_custom_call.1}
  #allocation0 [shape = 'u32[]', space=smem, size = 0x4, offset = 0x4, fixed_abs, tag = 'smem constant byte address 0x4 - core index']
  #allocation1 [shape = 'u32[72,128]{1,0:T(1,128)}', space=vmem, size = 0x9000, scoped, tag = 'internal scratch']
  %s0 = inlined_call_operand.hbm [shape: f32[4,32], index: 0, kind: input, shape index: {}]
  %s1 = inlined_call_operand.hbm [shape: f32[32,128], index: 1, kind: input, shape index: {}]
  %s2 = inlined_call_operand.vmem [shape: f32[1,128], index: 2, kind: input, shape index: {}]
  %s3 = inlined_call_operand.hbm [shape: bf16[128,128], index: 3, kind: input, shape index: {}]
  %s4 = inlined_call_operand.vmem [shape: f32[1,128], index: 4, kind: input, shape index: {}]
  %s5 = inlined_call_operand.hbm [shape: bf16[128,128], index: 5, kind: input, shape index: {}]
  %s6 = inlined_call_operand.vmem [shape: f32[1,128], index: 6, kind: input, shape index: {}]
  %s7 = inlined_call_operand.hbm [shape: f32[4,3], index: 7, kind: output, shape index: {}]
  %s8 = sld [smem:[#allocation0]]
  $region54: #{tpu_custom_call.1} parent=0
    _
  %s10 = ssub.s32 1, %s8
  %s11 = scalar_select 0, %s10, %s8
  $region1: #{tpu_custom_call.1} parent=0
    #allocation2 [shape = 'u8[2048]{0}', space=vmem, size = 0x800, scoped, tag = 'input window, operand 0, single buffered']
    #allocation3 [shape = 's32[1]{0}', space=sflag, size = 0x4, scoped, tag = 'scoped memory for tpu_custom_call.1']
    #allocation4 [shape = 's32[1]{0}', space=sflag, size = 0x4, scoped, tag = 'scoped memory for tpu_custom_call.1']
    #allocation5 [shape = 'u8[16384]{0}', space=vmem, size = 0x4000, scoped, tag = 'input window, operand 1, single buffered']
    #allocation6 [shape = 's32[1]{0}', space=sflag, size = 0x4, scoped, tag = 'scoped memory for tpu_custom_call.1']
    #allocation7 [shape = 'u8[32768]{0}', space=vmem, size = 0x8000, scoped, tag = 'input window, operand 3, single buffered']
    #allocation8 [shape = 'u8[32768]{0}', space=vmem, size = 0x8000, scoped, tag = 'input window, operand 5, single buffered']
    #allocation9 [shape = 's32[1]{0}', space=sflag, size = 0x4, scoped, tag = 'scoped memory for tpu_custom_call.1']
    #allocation10 [shape = 'u8[2048]{0}', space=vmem, size = 0x800, scoped, tag = 'output window, operand 0, single buffered']
    %12 = vsyncpa [#allocation3], 0
    %13 = vsyncpa [#allocation6], 0
    %14 = vsyncpa [#allocation9], 0
    %15 = vsyncpa [#allocation4], 0
    // Predicated region
    $region2: #{tpu_custom_call.1} parent=1 // pred_check
      _
    $region3: #{tpu_custom_call.1} parent=1 // pred_check_branch
      %17 = sbr.rel (0) target = $region5
    $region4: #{tpu_custom_call.1} parent=1 // pred_region
      %19 = vsyncadd [#allocation3], 0
      %s21 = sshll.u32 %s0, 4
      %s22 = int_to_ptr.hbm [resolvable:$true] %s21
      %s23 = sshll.u32 [#allocation2], 4
      %s24 = int_to_ptr.vmem [resolvable:$true] %s23
      %26 = dma.hbm_to_vmem [thread:$0]  %s22, 64, %s24, [#allocation3]
    $region5: #{tpu_custom_call.1} parent=1 // pred_fallthru
      _
    // Predicated region
    $region6: #{tpu_custom_call.1} parent=1 // pred_check
      _
    $region7: #{tpu_custom_call.1} parent=1 // pred_check_branch
      %28 = sbr.rel (0) target = $region9
    $region8: #{tpu_custom_call.1} parent=1 // pred_region
      %30 = vsyncadd [#allocation6], 0
      %s31 = sshll.u32 %s1, 4
      %s32 = int_to_ptr.hbm [resolvable:$true] %s31
      %s33 = sshll.u32 [#allocation5], 4
      %s34 = int_to_ptr.vmem [resolvable:$true] %s33
      %39 = dma.hbm_to_vmem [thread:$0]  %s32, 512, %s34, [#allocation6], 128, 128, 8
    $region9: #{tpu_custom_call.1} parent=1 // pred_fallthru
      _
    // Predicated region
    $region10: #{tpu_custom_call.1} parent=1 // pred_check
      _
    $region11: #{tpu_custom_call.1} parent=1 // pred_check_branch
      %41 = sbr.rel (0) target = $region13
    $region12: #{tpu_custom_call.1} parent=1 // pred_region
      _
    $region13: #{tpu_custom_call.1} parent=1 // pred_fallthru
      _
    // Predicated region
    $region14: #{tpu_custom_call.1} parent=1 // pred_check
      _
    $region15: #{tpu_custom_call.1} parent=1 // pred_check_branch
      %43 = sbr.rel (0) target = $region17
    $region16: #{tpu_custom_call.1} parent=1 // pred_region
      %45 = vsyncadd [#allocation6], 0
      %s46 = sshll.u32 %s3, 4
      %s47 = int_to_ptr.hbm [resolvable:$true] %s46
      %s48 = sshll.u32 [#allocation7], 4
      %s49 = int_to_ptr.vmem [resolvable:$true] %s48
      %54 = dma.hbm_to_vmem [thread:$0]  %s47, 1024, %s49, [#allocation6], 64, 64, 4
    $region17: #{tpu_custom_call.1} parent=1 // pred_fallthru
      _
    // Predicated region
    $region18: #{tpu_custom_call.1} parent=1 // pred_check
      _
    $region19: #{tpu_custom_call.1} parent=1 // pred_check_branch
      %56 = sbr.rel (0) target = $region21
    $region20: #{tpu_custom_call.1} parent=1 // pred_region
      _
    $region21: #{tpu_custom_call.1} parent=1 // pred_fallthru
      _
    // Predicated region
    $region22: #{tpu_custom_call.1} parent=1 // pred_check
      _
    $region23: #{tpu_custom_call.1} parent=1 // pred_check_branch
      %58 = sbr.rel (0) target = $region25
    $region24: #{tpu_custom_call.1} parent=1 // pred_region
      %60 = vsyncadd [#allocation9], 0
      %s61 = sshll.u32 %s5, 4
      %s62 = int_to_ptr.hbm [resolvable:$true] %s61
      %s63 = sshll.u32 [#allocation8], 4
      %s64 = int_to_ptr.vmem [resolvable:$true] %s63
      %69 = dma.hbm_to_vmem [thread:$0]  %s62, 1024, %s64, [#allocation9], 64, 64, 4
    $region25: #{tpu_custom_call.1} parent=1 // pred_fallthru
      _
    // Predicated region
    $region26: #{tpu_custom_call.1} parent=1 // pred_check
      _
    $region27: #{tpu_custom_call.1} parent=1 // pred_check_branch
      %71 = sbr.rel (0) target = $region29
    $region28: #{tpu_custom_call.1} parent=1 // pred_region
      _
    $region29: #{tpu_custom_call.1} parent=1 // pred_fallthru
      _
    // Predicated region
    $region30: #{tpu_custom_call.1} parent=1 // pred_check
      _
    $region31: #{tpu_custom_call.1} parent=1 // pred_check_branch
      %73 = sbr.rel (0) target = $region33
    $region32: #{tpu_custom_call.1} parent=1 // pred_region
      %75 = dma.done [#allocation3], 64
    $region33: #{tpu_custom_call.1} parent=1 // pred_fallthru
      _
    // Predicated region
    $region34: #{tpu_custom_call.1} parent=1 // pred_check
      _
    $region35: #{tpu_custom_call.1} parent=1 // pred_check_branch
      %77 = sbr.rel (0) target = $region37
    $region36: #{tpu_custom_call.1} parent=1 // pred_region
      %79 = dma.done [#allocation6], 512
    $region37: #{tpu_custom_call.1} parent=1 // pred_fallthru
      _
    // Predicated region
    $region38: #{tpu_custom_call.1} parent=1 // pred_check
      _
    $region39: #{tpu_custom_call.1} parent=1 // pred_check_branch
      %81 = sbr.rel (0) target = $region41
    $region40: #{tpu_custom_call.1} parent=1 // pred_region
      %83 = dma.done [#allocation6], 1024
    $region41: #{tpu_custom_call.1} parent=1 // pred_fallthru
      _
    // Predicated region
    $region42: #{tpu_custom_call.1} parent=1 // pred_check
      _
    $region43: #{tpu_custom_call.1} parent=1 // pred_check_branch
      %85 = sbr.rel (0) target = $region45
    $region44: #{tpu_custom_call.1} parent=1 // pred_region
      %87 = dma.done [#allocation9], 1024
    $region45: #{tpu_custom_call.1} parent=1 // pred_fallthru
      _
    %v88 = vld [vmem:[#allocation2] sm:$0xf]
    %v89 = vld [vmem:[#allocation5] sm:$0xff]
    %v90 = vld [vmem:[#allocation5 + $0x8] sm:$0xff]
    %v91 = vld [vmem:[#allocation5 + $0x10] sm:$0xff]
    %v92 = vld [vmem:[#allocation5 + $0x18] sm:$0xff]
    %v93 = vld [vmem:[%s2] sm:$0x1]
    %v95 = vperm.slane %v93, 0
    %vm97 = vcmask 261120
    %v99 = vsel %vm97, %v88, 0
    %101 = vmatpush.msra.mxu0 0.0
    %102 = vmatpush.msra.mxu0 0.0
    %103 = vmatpush.msra.mxu0 0.0
    %104 = vmatpush.msra.mxu0 0.0
    %105 = vmatpush.msra.mxu0 0.0
    %106 = vmatpush.msra.mxu0 0.0
    %107 = vmatpush.msra.mxu0 0.0
    %108 = vmatpush.msra.mxu0 0.0
    %109 = vmatpush.msra.mxu0 0.0
    %110 = vmatpush.msra.mxu0 0.0
    %111 = vmatpush.msra.mxu0 0.0
    %112 = vmatpush.msra.mxu0 0.0
    %113 = vmatpush.msra.mxu0 %v92
    %114 = vmatpush.msra.mxu0 %v91
    %115 = vmatpush.msra.mxu0 %v90
    %116 = vmatpush.msra.mxu0 %v89
    %117 = vmatmul.f32.gmra.mxu0 %v99
    %v118 = vpop.f32.mrf.mxu0
    %v119 = vadd.f32 %v95, %v118
    %120 = vdwg.mxu0
    %v121 = vmul.f32 %v119, %v119
    %v122 = vmul.f32 %v119, %v121
    %v123 = vmul.f32 %v122, 0.044715
    %v124 = vadd.f32 %v119, %v123
    %v125 = vmul.f32 %v124, 0.7978846
    %v126 = vtanh.pop %v125
    %v127 = vadd.f32 %v126, 1.0
    %v128 = vmul.f32 %v127, 0.5
    %v129 = vmul.f32 %v119, %v128
    %v130 = vpack.c.bf16 %v129, %v129
    %v131 = vld [vmem:[#allocation7] sm:$0xf]
    %v132 = vld [vmem:[#allocation7 + $0x4] sm:$0xf]
    %v133 = vld [vmem:[#allocation7 + $0x8] sm:$0xf]
    %v134 = vld [vmem:[#allocation7 + $0xc] sm:$0xf]
    %v135 = vld [vmem:[#allocation7 + $0x10] sm:$0xf]
    %v136 = vld [vmem:[#allocation7 + $0x14] sm:$0xf]
    %v137 = vld [vmem:[#allocation7 + $0x18] sm:$0xf]
    %v138 = vld [vmem:[#allocation7 + $0x1c] sm:$0xf]
    %v139 = vld [vmem:[#allocation7 + $0x20] sm:$0xf]
    %v140 = vld [vmem:[#allocation7 + $0x24] sm:$0xf]
    %v141 = vld [vmem:[#allocation7 + $0x28] sm:$0xf]
    %v142 = vld [vmem:[#allocation7 + $0x2c] sm:$0xf]
    %v143 = vld [vmem:[#allocation7 + $0x30] sm:$0xf]
    %v144 = vld [vmem:[#allocation7 + $0x34] sm:$0xf]
    %v145 = vld [vmem:[#allocation7 + $0x38] sm:$0xf]
    %v146 = vld [vmem:[#allocation7 + $0x3c] sm:$0xf]
    %v147 = vld [vmem:[%s4] sm:$0x1]
    %v149 = vperm.slane %v147, 0
    %v167 = vunpack.c.l.b16 %v131
    %v168 = vunpack.c.l.b16 %v132
    %v169 = vunpack.c.l.b16 %v133
    %v170 = vunpack.c.l.b16 %v134
    %v171 = vunpack.c.l.b16 %v135
    %v172 = vunpack.c.l.b16 %v136
    %v173 = vunpack.c.l.b16 %v137
    %v174 = vunpack.c.l.b16 %v138
    %v175 = vunpack.c.l.b16 %v139
    %v176 = vunpack.c.l.b16 %v140
    %v177 = vunpack.c.l.b16 %v141
    %v178 = vunpack.c.l.b16 %v142
    %v179 = vunpack.c.l.b16 %v143
    %v180 = vunpack.c.l.b16 %v144
    %v181 = vunpack.c.l.b16 %v145
    %v182 = vunpack.c.l.b16 %v146
    %v183 = vpack.c.b16 %v168, %v167
    %v184 = vpack.c.b16 %v170, %v169
    %v185 = vpack.c.b16 %v172, %v171
    %v186 = vpack.c.b16 %v174, %v173
    %v187 = vpack.c.b16 %v176, %v175
    %v188 = vpack.c.b16 %v178, %v177
    %v189 = vpack.c.b16 %v180, %v179
    %v190 = vpack.c.b16 %v182, %v181
    %199 = vmatpush.bf16.msra.mxu0 %v190
    %200 = vmatpush.bf16.msra.mxu0 %v189
    %201 = vmatpush.bf16.msra.mxu0 %v188
    %202 = vmatpush.bf16.msra.mxu0 %v187
    %203 = vmatpush.bf16.msra.mxu0 %v186
    %204 = vmatpush.bf16.msra.mxu0 %v185
    %205 = vmatpush.bf16.msra.mxu0 %v184
    %206 = vmatpush.bf16.msra.mxu0 %v183
    %207 = vmatmul.bf16.gmra.mxu0 %v130
    %v208 = vpop.f32.mrf.mxu0
    %v209 = vadd.f32 %v149, %v208
    %v210 = vpop.f32.mrf.mxu0
    %211 = vdwg.mxu0
    %v212 = vmul.f32 %v209, %v209
    %v213 = vmul.f32 %v209, %v212
    %v214 = vmul.f32 %v213, 0.044715
    %v215 = vadd.f32 %v209, %v214
    %v216 = vmul.f32 %v215, 0.7978846
    %v217 = vtanh.pop %v216
    %v218 = vadd.f32 %v217, 1.0
    %v219 = vmul.f32 %v218, 0.5
    %v220 = vmul.f32 %v209, %v219
    %v221 = vpack.c.bf16 %v220, %v220
    %v222 = vld [vmem:[#allocation8] sm:$0xf]
    %v223 = vld [vmem:[#allocation8 + $0x4] sm:$0xf]
    %v224 = vld [vmem:[#allocation8 + $0x8] sm:$0xf]
    %v225 = vld [vmem:[#allocation8 + $0xc] sm:$0xf]
    %v226 = vld [vmem:[#allocation8 + $0x10] sm:$0xf]
    %v227 = vld [vmem:[#allocation8 + $0x14] sm:$0xf]
    %v228 = vld [vmem:[#allocation8 + $0x18] sm:$0xf]
    %v229 = vld [vmem:[#allocation8 + $0x1c] sm:$0xf]
    %v230 = vld [vmem:[#allocation8 + $0x20] sm:$0xf]
    %v231 = vld [vmem:[#allocation8 + $0x24] sm:$0xf]
    %v232 = vld [vmem:[#allocation8 + $0x28] sm:$0xf]
    %v233 = vld [vmem:[#allocation8 + $0x2c] sm:$0xf]
    %v234 = vld [vmem:[#allocation8 + $0x30] sm:$0xf]
    %v235 = vld [vmem:[#allocation8 + $0x34] sm:$0xf]
    %v236 = vld [vmem:[#allocation8 + $0x38] sm:$0xf]
    %v237 = vld [vmem:[#allocation8 + $0x3c] sm:$0xf]
    %v238 = vld [vmem:[%s6] sm:$0x1]
    %v240 = vperm.slane %v238, 0
    %v258 = vunpack.c.l.b16 %v222
    %v259 = vunpack.c.l.b16 %v223
    %v260 = vunpack.c.l.b16 %v224
    %v261 = vunpack.c.l.b16 %v225
    %v262 = vunpack.c.l.b16 %v226
    %v263 = vunpack.c.l.b16 %v227
    %v264 = vunpack.c.l.b16 %v228
    %v265 = vunpack.c.l.b16 %v229
    %v266 = vunpack.c.l.b16 %v230
    %v267 = vunpack.c.l.b16 %v231
    %v268 = vunpack.c.l.b16 %v232
    %v269 = vunpack.c.l.b16 %v233
    %v270 = vunpack.c.l.b16 %v234
    %v271 = vunpack.c.l.b16 %v235
    %v272 = vunpack.c.l.b16 %v236
    %v273 = vunpack.c.l.b16 %v237
    %v274 = vpack.c.b16 %v259, %v258
    %v275 = vpack.c.b16 %v261, %v260
    %v276 = vpack.c.b16 %v263, %v262
    %v277 = vpack.c.b16 %v265, %v264
    %v278 = vpack.c.b16 %v267, %v266
    %v279 = vpack.c.b16 %v269, %v268
    %v280 = vpack.c.b16 %v271, %v270
    %v281 = vpack.c.b16 %v273, %v272
    %290 = vmatpush.bf16.msra.mxu0 %v281
    %291 = vmatpush.bf16.msra.mxu0 %v280
    %292 = vmatpush.bf16.msra.mxu0 %v279
    %293 = vmatpush.bf16.msra.mxu0 %v278
    %294 = vmatpush.bf16.msra.mxu0 %v277
    %295 = vmatpush.bf16.msra.mxu0 %v276
    %296 = vmatpush.bf16.msra.mxu0 %v275
    %297 = vmatpush.bf16.msra.mxu0 %v274
    %298 = vmatmul.bf16.gmra.mxu0 %v221
    %v299 = vpop.f32.mrf.mxu0
    %v300 = vadd.f32 %v240, %v299
    %v301 = vpop.f32.mrf.mxu0
    %302 = vdwg.mxu0
    %vm303 = vcmask 19456
    %304 = vst.msk [vmem:[#allocation10] sm:$0xf] %vm303, %v300
    // Predicated region
    $region46: #{tpu_custom_call.1} parent=1 // pred_check
      _
    $region47: #{tpu_custom_call.1} parent=1 // pred_check_branch
      %306 = sbr.rel (0) target = $region49
    $region48: #{tpu_custom_call.1} parent=1 // pred_region
      %308 = vsyncadd [#allocation4], 0
      %s310 = sshll.u32 [#allocation10], 4
      %s311 = int_to_ptr.vmem [resolvable:$true] %s310
      %s312 = sshll.u32 %s7, 4
      %s313 = int_to_ptr.hbm [resolvable:$true] %s312
      %315 = dma.vmem_to_hbm [thread:$0]  %s311, 64, %s313, [#allocation4]
    $region49: #{tpu_custom_call.1} parent=1 // pred_fallthru
      _
    // Predicated region
    $region50: #{tpu_custom_call.1} parent=1 // pred_check
      _
    $region51: #{tpu_custom_call.1} parent=1 // pred_check_branch
      %317 = sbr.rel (0) target = $region53
    $region52: #{tpu_custom_call.1} parent=1 // pred_region
      %319 = dma.done [#allocation4], 64
    $region53: #{tpu_custom_call.1} parent=1 // pred_fallthru
      _
    %320 = vsyncpa [#allocation3], 1
    %321 = vsyncpa [#allocation6], 1
    %322 = vsyncpa [#allocation9], 1
    %323 = vsyncpa [#allocation4], 1

</llo_original>
